<compile_context>
chip_gen: v6e
topology: v6e:2x2x1
jax: 0.10.0
libtpu: 0.0.40
codegen_flags: <defaults>
</compile_context>

<pallas_src>
import functools

import jax
import jax.numpy as jnp
from jax import lax
from jax.experimental import pallas as pl
from jax.experimental.pallas import tpu as pltpu


def _round_up(x: int, m: int) -> int:
    return (x + m - 1) // m * m


def _largest_div_tile(n: int, cap: int):
    """Largest multiple of 128 that divides n and is <= cap (None if none exists)."""
    best = None
    for t in range(128, min(cap, n) + 1, 128):
        if n % t == 0:
            best = t
    return best


def _vmem_capacity_bytes() -> int:
    try:
        return int(pltpu.get_tpu_info().vmem_capacity_bytes)
    except Exception:
        return 64 << 20  # conservative fallback: v7x per-TensorCore VMEM


def _device_kind() -> str:
    try:
        return jax.devices()[0].device_kind.lower()
    except Exception:
        return ""


def _plan_tiles(tokens, dim, inter, tm_req, tn_req):
    """Static (trace-time) tile planning.

    Returns (tm_eff, tn_eff, tokens_p, inter_p, vmem_limit_bytes).
    """
    vmem_cap = _vmem_capacity_bytes()
    if tm_req is None or tn_req is None:
        kind = _device_kind()
        if "v5" in kind and vmem_cap >= (96 << 20):
            # v5e: ridge ~240 FLOP/B -> tm=256 near balance; big tn cuts inter steps
            # (fewer f32 accumulator RMW passes; only 1 vst slot per bundle).
            tm_d, tn_d = 256, 1024
        elif "v6" in kind:
            # v6e: ridge ~680 FLOP/B w.r.t. streamed weights -> larger token tile.
            tm_d, tn_d = 768, 512
        elif vmem_cap <= (64 << 20):
            # v7x-like (64 MiB/TC, ~3.2 TB/s HBM): ridge ~310 FLOP/B, tight VMEM.
            tm_d, tn_d = 384, 512
        else:
            tm_d, tn_d = 512, 512
    tm_t = tm_req if tm_req is not None else tm_d
    tn_t = tn_req if tn_req is not None else tn_d
    tm_t = max(16, _round_up(tm_t, 16))      # bf16 packs 16 rows per vreg
    tn_t = max(128, _round_up(tn_t, 128))    # lane-aligned inter tiles

    def pick_tn(cap):
        d = _largest_div_tile(inter, cap)
        if d is not None:
            return d, inter                             # divides inter: no padding
        t = min(cap, _round_up(inter, 128))
        return t, _round_up(inter, t)                   # zero-pad inter (harmless rows)

    tn_eff, inter_p = pick_tn(tn_t)

    # Megacore-aware token tile: keep >= 2 M tiles so both v7x TensorCores get work.
    tm_eff = min(tm_t, max(16, _round_up((tokens + 1) // 2, 16)))

    # Shrink tiles to a VMEM budget (leave headroom for compiler internal scratch).
    budget = int(0.70 * vmem_cap)
    footprint = lambda tm, tn: 12 * dim * (tm + tn)     # f32 acc + double-buffered bf16 tiles
    while footprint(tm_eff, tn_eff) > budget and tn_eff > 128:
        tn_eff, inter_p = pick_tn(max(128, tn_eff - 128))
    while footprint(tm_eff, tn_eff) > budget and tm_eff > 16:
        tm_eff = max(16, _round_up(tm_eff // 2, 16))

    tokens_p = _round_up(tokens, tm_eff)
    vmem_limit = min(int(0.92 * vmem_cap), footprint(tm_eff, tn_eff) + (16 << 20))
    vmem_limit = max(vmem_limit, 32 << 20)
    return tm_eff, tn_eff, tokens_p, inter_p, vmem_limit


def mlp_kernel(x_ref, w1_ref, w3_ref, w2_ref, o_ref, acc_ref):
    # x_ref:   (tm, dim) bf16  token tile (reused across the inter axis)
    # w1_ref:  (tn, dim) bf16  gate-proj rows (PyTorch (out, in) layout)
    # w3_ref:  (tn, dim) bf16  up-proj rows
    # w2_ref:  (tn, dim) bf16  down-proj rows (w2 pre-transposed once at load time)
    # o_ref:   (tm, dim) bf16  output tile (written once, on the last inter step)
    # acc_ref: (tm, dim) f32   VMEM accumulator
    j = pl.program_id(1)

    @pl.when(j == 0)
    def _():
        acc_ref[...] = jnp.zeros_like(acc_ref)

    x = x_ref[...]
    # Gate / up projections: contract x's dim axis with W's dim axis (== x @ W^T,
    # no transpose materialized anywhere).
    h1 = lax.dot_general(x, w1_ref[...], (((1,), (1,)), ((), ())),
                         preferred_element_type=jnp.float32)
    h3 = lax.dot_general(x, w3_ref[...], (((1,), (1,)), ((), ())),
                         preferred_element_type=jnp.float32)
    # SiLU(h1) * h3 in f32 (sigmoid -> EUP slot, mul/mac -> VPU).
    h = (h1 * jax.nn.sigmoid(h1)) * h3
    # Natural (tm, tn) @ (tn, dim) down-projection partial for this inter tile.
    partial = lax.dot_general(h.astype(jnp.bfloat16), w2_ref[...],
                              (((1,), (0,)), ((), ())),
                              preferred_element_type=jnp.float32)

    last = j == pl.num_programs(1) - 1

    @pl.when(jnp.logical_not(last))
    def _():
        acc_ref[...] += partial

    @pl.when(last)
    def _():
        # Fused final add + cast: avoids one full (tm, dim) f32 store + reload.
        o_ref[...] = (acc_ref[...] + partial).astype(o_ref.dtype)


def prepare_mlp_weights(w1, w2, w3):
    """One-time (load-side) re-layout: w2 (dim, inter) -> (inter, dim). Call once."""
    return w1, jnp.transpose(w2), w3


@functools.partial(jax.jit, static_argnames=("tm", "tn"))
def mlp_forward(x, w1, w2t, w3, *, tm=None, tn=None):
    """x: (tokens, dim) bf16; w1/w3: (inter, dim) bf16; w2t: (inter, dim) bf16 (pre-transposed w2)."""
    tokens, dim = x.shape
    inter = w1.shape[0]
    assert w1.shape == (inter, dim) and w3.shape == (inter, dim)
    assert w2t.shape == (inter, dim), "pass w2 pre-transposed via prepare_mlp_weights"

    tm_eff, tn_eff, tokens_p, inter_p, vmem_limit = _plan_tiles(tokens, dim, inter, tm, tn)
    assert tm_eff % 16 == 0 and tn_eff % 128 == 0

    if tokens_p != tokens:
        x = jnp.pad(x, ((0, tokens_p - tokens), (0, 0)))
    if inter_p != inter:
        # TODO(synk): fold this zero-pad into prepare_mlp_weights so it is truly one-time.
        pad = ((0, inter_p - inter), (0, 0))
        w1, w3, w2t = (jnp.pad(w, pad) for w in (w1, w3, w2t))

    m_tiles = tokens_p // tm_eff
    grid = (m_tiles, inter_p // tn_eff)

    try:
        cost = pl.CostEstimate(
            flops=6 * tokens_p * inter_p * dim,
            transcendentals=tokens_p * inter_p,
            bytes_accessed=2 * tokens_p * dim * 2 + 3 * inter_p * dim * 2 * m_tiles,
        )
    except Exception:
        cost = None

    out = pl.pallas_call(
        mlp_kernel,
        out_shape=jax.ShapeDtypeStruct((tokens_p, dim), jnp.bfloat16),
        grid_spec=pltpu.PrefetchScalarGridSpec(
            num_scalar_prefetch=0,
            grid=grid,
            in_specs=[
                pl.BlockSpec((tm_eff, dim), lambda i, j: (i, 0)),   # x (resident across j)
                pl.BlockSpec((tn_eff, dim), lambda i, j: (j, 0)),   # w1 rows, streamed
                pl.BlockSpec((tn_eff, dim), lambda i, j: (j, 0)),   # w3 rows, streamed
                pl.BlockSpec((tn_eff, dim), lambda i, j: (j, 0)),   # w2^T rows, streamed
            ],
            out_specs=pl.BlockSpec((tm_eff, dim), lambda i, j: (i, 0)),
            scratch_shapes=[pltpu.VMEM((tm_eff, dim), jnp.float32)],
        ),
        compiler_params=pltpu.CompilerParams(
            dimension_semantics=("parallel", "arbitrary"),
            vmem_limit_bytes=vmem_limit,
        ),
        cost_estimate=cost,
    )(x, w1, w3, w2t)

    return out[:tokens] if tokens_p != tokens else out


if __name__ == "__main__":
    key = jax.random.PRNGKey(0)
    k_x, k1, k2, k3 = jax.random.split(key, 4)

    # Small shapes: batch=2, seq=25 -> 50 tokens (exercises ragged token padding),
    # dim=256, inter_dim=512.
    batch, seq = 2, 25
    tokens = batch * seq
    dim = 256
    inter_dim = 512

    x = jax.random.normal(k_x, (tokens, dim), dtype=jnp.float32).astype(jnp.bfloat16)
    # Parameter shapes follow nn.Linear(out_features, in_features).
    w1 = (0.02 * jax.random.normal(k1, (inter_dim, dim), dtype=jnp.float32)).astype(jnp.bfloat16)
    w2 = (0.02 * jax.random.normal(k2, (dim, inter_dim), dtype=jnp.float32)).astype(jnp.bfloat16)
    w3 = (0.02 * jax.random.normal(k3, (inter_dim, dim), dtype=jnp.float32)).astype(jnp.bfloat16)

    # One-time load-side re-layout of w2.
    w1p, w2t, w3p = prepare_mlp_weights(w1, w2, w3)

    # Reference in plain JAX (same math / casts as the bf16 F.linear path).
    xf = x.astype(jnp.float32)
    h1 = xf @ w1.astype(jnp.float32).T
    h3 = xf @ w3.astype(jnp.float32).T
    href = (h1 * jax.nn.sigmoid(h1)) * h3
    yref = (href.astype(jnp.bfloat16).astype(jnp.float32)
            @ w2.astype(jnp.float32).T).astype(jnp.bfloat16)

    # 1) Explicit small tiles: exercises token padding and a (2, 2) grid with the
    #    inter-axis accumulation loop.
    y1 = jax.block_until_ready(mlp_forward(x, w1p, w2t, w3p, tm=32, tn=256))
    # 2) Auto per-chip tiles (megacore clamp + VMEM-budgeted planning).
    y2 = jax.block_until_ready(mlp_forward(x, w1p, w2t, w3p))

    for y in (y1, y2):
        assert y.shape == (tokens, dim) and y.dtype == jnp.bfloat16
        assert jnp.allclose(y.astype(jnp.float32), yref.astype(jnp.float32),
                            atol=2e-2, rtol=2e-2)

    print("KERNEL_OK")
</pallas_src>

<mosaic_0001>
module attributes {stable_mosaic.version = 11 : i64} {
  func.func @mlp_kernel(%arg0: i32, %arg1: i32, %arg2: memref<32x256xbf16, #tpu.memory_space<vmem>>, %arg3: memref<256x256xbf16, #tpu.memory_space<vmem>>, %arg4: memref<256x256xbf16, #tpu.memory_space<vmem>>, %arg5: memref<256x256xbf16, #tpu.memory_space<vmem>>, %arg6: memref<32x256xbf16, #tpu.memory_space<vmem>>, %arg7: memref<32x256xf32, #tpu.memory_space<vmem>>) attributes {dimension_semantics = [#tpu.dimension_semantics<parallel>, #tpu.dimension_semantics<arbitrary>], iteration_bounds = array<i64: 2, 2>, scalar_prefetch = 0 : i64, scratch_operands = 1 : i64, tpu.core_type = #tpu.core_type<tc>, window_params = [{transform_indices = @transform_0, window_bounds = array<i64: 32, 256>}, {transform_indices = @transform_1, window_bounds = array<i64: 256, 256>}, {transform_indices = @transform_2, window_bounds = array<i64: 256, 256>}, {transform_indices = @transform_3, window_bounds = array<i64: 256, 256>}, {transform_indices = @transform_4, window_bounds = array<i64: 32, 256>}]} {
    %c0_i32 = arith.constant 0 : i32
    %0 = arith.cmpi eq, %arg1, %c0_i32 : i32
    %1 = arith.extui %0 : i1 to i32
    %c0_i32_0 = arith.constant 0 : i32
    %2 = arith.cmpi ne, %1, %c0_i32_0 : i32
    scf.if %2 {
      %cst_13 = arith.constant 0.000000e+00 : f32
      %24 = vector.broadcast %cst_13 : f32 to vector<32x256xf32>
      %c0_14 = arith.constant 0 : index
      %c0_15 = arith.constant 0 : index
      %25 = vector.load %arg7[%c0_14, %c0_15] : memref<32x256xf32, #tpu.memory_space<vmem>>, vector<32x256xf32>
      tpu.vector_store %arg7[%c0_14, %c0_15], %24 {strides = array<i32>} : memref<32x256xf32, #tpu.memory_space<vmem>>, vector<32x256xf32>,
    } else {
    }
    %c0 = arith.constant 0 : index
    %c0_1 = arith.constant 0 : index
    %3 = vector.load %arg2[%c0, %c0_1] : memref<32x256xbf16, #tpu.memory_space<vmem>>, vector<32x256xbf16>
    %c0_2 = arith.constant 0 : index
    %c0_3 = arith.constant 0 : index
    %4 = vector.load %arg3[%c0_2, %c0_3] : memref<256x256xbf16, #tpu.memory_space<vmem>>, vector<256x256xbf16>
    %cst = arith.constant dense<0.000000e+00> : vector<32x256xf32>
    %5 = tpu.matmul %3, %4, %cst {dimension_numbers = #tpu.dot_dimension_numbers<[1], [1], [0], [0], [0, 0, 1, 0], [], []>} : vector<32x256xbf16>, vector<256x256xbf16>, vector<32x256xf32> -> vector<32x256xf32>
    %c0_4 = arith.constant 0 : index
    %c0_5 = arith.constant 0 : index
    %6 = vector.load %arg4[%c0_4, %c0_5] : memref<256x256xbf16, #tpu.memory_space<vmem>>, vector<256x256xbf16>
    %cst_6 = arith.constant dense<0.000000e+00> : vector<32x256xf32>
    %7 = tpu.matmul %3, %6, %cst_6 {dimension_numbers = #tpu.dot_dimension_numbers<[1], [1], [0], [0], [0, 0, 1, 0], [], []>} : vector<32x256xbf16>, vector<256x256xbf16>, vector<32x256xf32> -> vector<32x256xf32>
    %8 = arith.negf %5 : vector<32x256xf32>
    %9 = math.exp %8 : vector<32x256xf32>
    %cst_7 = arith.constant 1.000000e+00 : f32
    %10 = vector.broadcast %cst_7 : f32 to vector<32x256xf32>
    %11 = arith.addf %10, %9 : vector<32x256xf32>
    %12 = arith.divf %10, %11 : vector<32x256xf32>
    %13 = arith.mulf %5, %12 : vector<32x256xf32>
    %14 = arith.mulf %13, %7 : vector<32x256xf32>
    %15 = arith.truncf %14 : vector<32x256xf32> to vector<32x256xbf16>
    %c0_8 = arith.constant 0 : index
    %c0_9 = arith.constant 0 : index
    %16 = vector.load %arg5[%c0_8, %c0_9] : memref<256x256xbf16, #tpu.memory_space<vmem>>, vector<256x256xbf16>
    %cst_10 = arith.constant dense<0.000000e+00> : vector<32x256xf32>
    %17 = tpu.matmul %15, %16, %cst_10 {dimension_numbers = #tpu.dot_dimension_numbers<[1], [0], [0], [1], [0, 0, 1, 1], [], []>} : vector<32x256xbf16>, vector<256x256xbf16>, vector<32x256xf32> -> vector<32x256xf32>
    %c1_i32 = arith.constant 1 : i32
    %18 = arith.cmpi eq, %arg1, %c1_i32 : i32
    %true = arith.constant true
    %19 = arith.xori %18, %true : i1
    %20 = arith.extui %19 : i1 to i32
    %c0_i32_11 = arith.constant 0 : i32
    %21 = arith.cmpi ne, %20, %c0_i32_11 : i32
    scf.if %21 {
      %c0_13 = arith.constant 0 : index
      %c0_14 = arith.constant 0 : index
      %24 = vector.load %arg7[%c0_13, %c0_14] : memref<32x256xf32, #tpu.memory_space<vmem>>, vector<32x256xf32>
      %25 = arith.addf %24, %17 : vector<32x256xf32>
      %c0_15 = arith.constant 0 : index
      %c0_16 = arith.constant 0 : index
      %26 = vector.load %arg7[%c0_15, %c0_16] : memref<32x256xf32, #tpu.memory_space<vmem>>, vector<32x256xf32>
      tpu.vector_store %arg7[%c0_15, %c0_16], %25 {strides = array<i32>} : memref<32x256xf32, #tpu.memory_space<vmem>>, vector<32x256xf32>,
    } else {
    }
    %22 = arith.extui %18 : i1 to i32
    %c0_i32_12 = arith.constant 0 : i32
    %23 = arith.cmpi ne, %22, %c0_i32_12 : i32
    scf.if %23 {
      %c0_13 = arith.constant 0 : index
      %c0_14 = arith.constant 0 : index
      %24 = vector.load %arg7[%c0_13, %c0_14] : memref<32x256xf32, #tpu.memory_space<vmem>>, vector<32x256xf32>
      %25 = arith.addf %24, %17 : vector<32x256xf32>
      %26 = arith.truncf %25 : vector<32x256xf32> to vector<32x256xbf16>
      %c0_15 = arith.constant 0 : index
      %c0_16 = arith.constant 0 : index
      %27 = vector.load %arg6[%c0_15, %c0_16] : memref<32x256xbf16, #tpu.memory_space<vmem>>, vector<32x256xbf16>
      tpu.vector_store %arg6[%c0_15, %c0_16], %26 {strides = array<i32>} : memref<32x256xbf16, #tpu.memory_space<vmem>>, vector<32x256xbf16>,
    } else {
    }
    return
  }
  func.func @transform_0(%arg0: i32, %arg1: i32) -> (i32, i32) {
    %c0_i32 = arith.constant 0 : i32
    %c0_i32_0 = arith.constant 0 : i32
    return %arg0, %c0_i32 : i32, i32
  }
  func.func @transform_1(%arg0: i32, %arg1: i32) -> (i32, i32) {
    %c0_i32 = arith.constant 0 : i32
    %c0_i32_0 = arith.constant 0 : i32
    return %arg1, %c0_i32 : i32, i32
  }
  func.func @transform_2(%arg0: i32, %arg1: i32) -> (i32, i32) {
    %c0_i32 = arith.constant 0 : i32
    %c0_i32_0 = arith.constant 0 : i32
    return %arg1, %c0_i32 : i32, i32
  }
  func.func @transform_3(%arg0: i32, %arg1: i32) -> (i32, i32) {
    %c0_i32 = arith.constant 0 : i32
    %c0_i32_0 = arith.constant 0 : i32
    return %arg1, %c0_i32 : i32, i32
  }
  func.func @transform_4(%arg0: i32, %arg1: i32) -> (i32, i32) {
    %c0_i32 = arith.constant 0 : i32
    %c0_i32_0 = arith.constant 0 : i32
    return %arg0, %c0_i32 : i32, i32
  }
}

</mosaic_0001>

<llo_original>
// kernel: mlp_forward.1
$region0: #{mlp_forward.1}
  #allocation0 [shape = 'u32[]', space=smem, size = 0x4, offset = 0x4, fixed_abs, tag = 'smem constant byte address 0x4 - core index']
  #allocation1 [shape = 'u32[144,128]{1,0:T(1,128)}', space=vmem, size = 0x12000, scoped, tag = 'internal scratch']
  #allocation2 [shape = 'f32[32,256]{1,0:T(8,128)}', space=vmem, size = 0x8000, scoped, tag = 'scratch operand']
  %s0 = inlined_call_operand.vmem [shape: bf16[64,256], index: 0, kind: input, shape index: {}]
  %s1 = inlined_call_operand.hbm [shape: bf16[512,256], index: 1, kind: input, shape index: {}]
  %s2 = inlined_call_operand.hbm [shape: bf16[512,256], index: 2, kind: input, shape index: {}]
  %s3 = inlined_call_operand.hbm [shape: bf16[512,256], index: 3, kind: input, shape index: {}]
  %s4 = inlined_call_operand.vmem [shape: bf16[64,256], index: 4, kind: output, shape index: {}]
  %s5 = sld [smem:[#allocation0]]
  $region73: #{mlp_forward.1} parent=0
    _
  %s7 = ssub.s32 1, %s5
  %s8 = scalar_select 0, %s7, %s5
  $region1: #{mlp_forward.1} parent=0
    #allocation3 [shape = 'u8[262144]{0}', space=vmem, size = 0x40000, scoped, tag = 'input window, operand 1']
    #allocation4 [shape = 's32[2]{0}', space=sflag, size = 0x8, scoped, tag = 'scoped memory for mlp_forward.1']
    #allocation5 [shape = 'u8[262144]{0}', space=vmem, size = 0x40000, scoped, tag = 'input window, operand 2']
    #allocation6 [shape = 's32[2]{0}', space=sflag, size = 0x8, scoped, tag = 'scoped memory for mlp_forward.1']
    #allocation7 [shape = 'u8[262144]{0}', space=vmem, size = 0x40000, scoped, tag = 'input window, operand 3']
    %9 = vsyncpa [#allocation4], 0
    %s10 = scalar_lea.sflag [#allocation4], 1
    %11 = vsyncpa %s10, 0
    %12 = vsyncpa [#allocation6], 0
    %s13 = scalar_lea.sflag [#allocation6], 1
    %14 = vsyncpa %s13, 0
    loop: start=0, step=1, limit=6
    $region2: #{mlp_forward.1} parent=1 // loop_pre_header
      _
    $region3: #{mlp_forward.1} parent=1 // loop_header
      %s16 = sphi 0, %s20
      %p17 = scmp.ge.s32.totalorder %s16, 6
      %s23 = sphi 0, %s35
      %s24 = sphi 0, %s31
      %s25 = sphi 0, %s23
      %s26 = sphi 0, %s24
      %s27 = sphi 0, %s25
      %s28 = sphi 0, %s26
      %s38 = sphi 0, %s40
      %s41 = sphi 0, %s38
      %s42 = sphi 0, %s41
      %s58 = sphi 0, %s42
      %s64 = sphi 0, %s66
      %s67 = sphi 0, %s64
      %s68 = sphi 0, %s67
      %s84 = sphi 0, %s68
      %s90 = sphi 0, %s92
      %s93 = sphi 0, %s90
      %s94 = sphi 0, %s93
      %s110 = sphi 0, %s94
      %s116 = sphi 0, %s118
      %s119 = sphi 0, %s116
      %s120 = sphi 0, %s119
      %s136 = sphi 0, %s120
      %s142 = sphi 0, %s144
      %s145 = sphi 0, %s142
      %s146 = sphi 0, %s145
      %s162 = sphi 0, %s146
    $region4: #{mlp_forward.1} parent=1 // loop_header_branch
      %19 = sbr.rel (%p17) target = $region8
    $region5: #{mlp_forward.1} parent=1 // loop_body
      %s21 = ssub.s32 %s16, 1
      %s22 = ssub.s32 %s16, 2
      %s29 = sadd.s32 1, %s24
      %p30 = scmp.ge.s32.totalorder %s29, 2
      %s31 = scalar_select %p30, 0, %s29
      %s32 = sadd.s32 1, %s23
      %s33 = scalar_select %p30, %s32, %s23
      %p34 = scmp.ge.s32.totalorder %s33, 2
      %s35 = scalar_select %p34, 0, %s33
      %s36 = ssub.s32 %s23, %s35
      %p37 = scmp.eq.s32.totalorder %s36, 0
      %s39 = sadd.s32 %s38, 1
      %s40 = scalar_select %p37, %s38, %s39
      %p43 = pneg %p37
      %p44 = scmp.eq.s32.totalorder %s16, 3
      %p45 = por %p43, %p44
      %p46 = scmp.ne.s32.totalorder %s38, %s41
      %p47 = scmp.eq.s32.totalorder %s16, 0
      %p48 = por %p46, %p47
      %p49 = scmp.ne.s32.totalorder %s38, %s41
      %p50 = scmp.eq.s32.totalorder %s21, 3
      %p51 = por %p49, %p50
      %p52 = scmp.ne.s32.totalorder %s41, %s42
      %p53 = scmp.eq.s32.totalorder %s21, 0
      %p54 = por %p52, %p53
      %p55 = scmp.ne.s32.totalorder %s41, %s42
      %p56 = scmp.eq.s32.totalorder %s22, 3
      %p57 = por %p55, %p56
      %p59 = scmp.ne.s32.totalorder %s42, %s58
      %p60 = scmp.eq.s32.totalorder %s22, 0
      %p61 = por %p59, %p60
      %s62 = ssub.s32 %s24, %s31
      %p63 = scmp.eq.s32.totalorder %s62, 0
      %s65 = sadd.s32 %s64, 1
      %s66 = scalar_select %p63, %s64, %s65
      %p69 = pneg %p63
      %p70 = scmp.eq.s32.totalorder %s16, 3
      %p71 = por %p69, %p70
      %p72 = scmp.ne.s32.totalorder %s64, %s67
      %p73 = scmp.eq.s32.totalorder %s16, 0
      %p74 = por %p72, %p73
      %p75 = scmp.ne.s32.totalorder %s64, %s67
      %p76 = scmp.eq.s32.totalorder %s21, 3
      %p77 = por %p75, %p76
      %p78 = scmp.ne.s32.totalorder %s67, %s68
      %p79 = scmp.eq.s32.totalorder %s21, 0
      %p80 = por %p78, %p79
      %p81 = scmp.ne.s32.totalorder %s67, %s68
      %p82 = scmp.eq.s32.totalorder %s22, 3
      %p83 = por %p81, %p82
      %p85 = scmp.ne.s32.totalorder %s68, %s84
      %p86 = scmp.eq.s32.totalorder %s22, 0
      %p87 = por %p85, %p86
      %s88 = ssub.s32 %s24, %s31
      %p89 = scmp.eq.s32.totalorder %s88, 0
      %s91 = sadd.s32 %s90, 1
      %s92 = scalar_select %p89, %s90, %s91
      %p95 = pneg %p89
      %p96 = scmp.eq.s32.totalorder %s16, 3
      %p97 = por %p95, %p96
      %p98 = scmp.ne.s32.totalorder %s90, %s93
      %p99 = scmp.eq.s32.totalorder %s16, 0
      %p100 = por %p98, %p99
      %p101 = scmp.ne.s32.totalorder %s90, %s93
      %p102 = scmp.eq.s32.totalorder %s21, 3
      %p103 = por %p101, %p102
      %p104 = scmp.ne.s32.totalorder %s93, %s94
      %p105 = scmp.eq.s32.totalorder %s21, 0
      %p106 = por %p104, %p105
      %p107 = scmp.ne.s32.totalorder %s93, %s94
      %p108 = scmp.eq.s32.totalorder %s22, 3
      %p109 = por %p107, %p108
      %p111 = scmp.ne.s32.totalorder %s94, %s110
      %p112 = scmp.eq.s32.totalorder %s22, 0
      %p113 = por %p111, %p112
      %s114 = ssub.s32 %s24, %s31
      %p115 = scmp.eq.s32.totalorder %s114, 0
      %s117 = sadd.s32 %s116, 1
      %s118 = scalar_select %p115, %s116, %s117
      %p121 = pneg %p115
      %p122 = scmp.eq.s32.totalorder %s16, 3
      %p123 = por %p121, %p122
      %p124 = scmp.ne.s32.totalorder %s116, %s119
      %p125 = scmp.eq.s32.totalorder %s16, 0
      %p126 = por %p124, %p125
      %p127 = scmp.ne.s32.totalorder %s116, %s119
      %p128 = scmp.eq.s32.totalorder %s21, 3
      %p129 = por %p127, %p128
      %p130 = scmp.ne.s32.totalorder %s119, %s120
      %p131 = scmp.eq.s32.totalorder %s21, 0
      %p132 = por %p130, %p131
      %p133 = scmp.ne.s32.totalorder %s119, %s120
      %p134 = scmp.eq.s32.totalorder %s22, 3
      %p135 = por %p133, %p134
      %p137 = scmp.ne.s32.totalorder %s120, %s136
      %p138 = scmp.eq.s32.totalorder %s22, 0
      %p139 = por %p137, %p138
      %s140 = ssub.s32 %s23, %s35
      %p141 = scmp.eq.s32.totalorder %s140, 0
      %s143 = sadd.s32 %s142, 1
      %s144 = scalar_select %p141, %s142, %s143
      %p147 = pneg %p141
      %p148 = scmp.eq.s32.totalorder %s16, 3
      %p149 = por %p147, %p148
      %p150 = scmp.ne.s32.totalorder %s142, %s145
      %p151 = scmp.eq.s32.totalorder %s16, 0
      %p152 = por %p150, %p151
      %p153 = scmp.ne.s32.totalorder %s142, %s145
      %p154 = scmp.eq.s32.totalorder %s21, 3
      %p155 = por %p153, %p154
      %p156 = scmp.ne.s32.totalorder %s145, %s146
      %p157 = scmp.eq.s32.totalorder %s21, 0
      %p158 = por %p156, %p157
      %p159 = scmp.ne.s32.totalorder %s145, %s146
      %p160 = scmp.eq.s32.totalorder %s22, 3
      %p161 = por %p159, %p160
      %p163 = scmp.ne.s32.totalorder %s146, %s162
      %p164 = scmp.eq.s32.totalorder %s22, 0
      %p165 = por %p163, %p164
      %p166 = scmp.le.s32.totalorder 1, %s16
      %p167 = scmp.lt.s32.totalorder %s16, 5
      %p168 = pnand %p166, %p167
      %p169 = pneg %p168
      // Predicated region
      $region9: #{mlp_forward.1} parent=5 // pred_check
        _
      $region10: #{mlp_forward.1} parent=5 // pred_check_branch
        %171 = sbr.rel (%p168) target = $region12
      $region11: #{mlp_forward.1} parent=5 // pred_region
        %s172 = ssub.s32 %s16, 1
      $region12: #{mlp_forward.1} parent=5 // pred_fallthru
        _
      %p173 = scmp.lt.s32.totalorder %s16, 4
      // Predicated region
      $region13: #{mlp_forward.1} parent=5 // pred_check
        %p174 = pneg %p173
      $region14: #{mlp_forward.1} parent=5 // pred_check_branch
        %176 = sbr.rel (%p174) target = $region16
      $region15: #{mlp_forward.1} parent=5 // pred_region
        // Predicated region
        $region17: #{mlp_forward.1} parent=15 // pred_check
          %p177 = pneg %p48
        $region18: #{mlp_forward.1} parent=15 // pred_check_branch
          %179 = sbr.rel (%p177) target = $region20
        $region19: #{mlp_forward.1} parent=15 // pred_region
          %s180 = smul.u32 4, %s23
          %p181 = scmp.lt.s32.totalorder %s180, 7
          %s182 = scalar_select %p181, %s180, 7
          %s183 = smul.addr %s182, 2
          %s184 = smul.addr %s183, 4
          %s185 = scalar_lea.vmem %s0, %s184
          %s186 = smul.u32 4, %s23
        $region20: #{mlp_forward.1} parent=15 // pred_fallthru
          _
        // Predicated region
        $region21: #{mlp_forward.1} parent=15 // pred_check
          %p187 = pneg %p74
        $region22: #{mlp_forward.1} parent=15 // pred_check_branch
          %189 = sbr.rel (%p187) target = $region24
        $region23: #{mlp_forward.1} parent=15 // pred_region
          %s190 = sand.u32 %s64, 1
          %s191 = scalar_lea.sflag [#allocation4], %s190
          %s192 = sand.u32 %s64, 1
          %s193 = smul.addr %s192, 256
          %s194 = scalar_lea.vmem [#allocation3], %s193
          %s195 = smul.u32 32, %s24
          %s197 = ssub.s32 4096, 4096
          %198 = vsyncadd %s191, %s197
          %s199 = smul.addr %s195, 2
          %s200 = smul.addr %s199, 64
          %s201 = scalar_lea.hbm %s1, %s200
          %s202 = sshll.u32 %s194, 4
          %s203 = int_to_ptr.vmem [resolvable:$true] %s202
          %208 = dma.hbm_to_vmem [thread:$0]  %s201, 4096, %s203, %s191, 128, 128, 8
        $region24: #{mlp_forward.1} parent=15 // pred_fallthru
          _
        // Predicated region
        $region25: #{mlp_forward.1} parent=15 // pred_check
          %p209 = pneg %p100
        $region26: #{mlp_forward.1} parent=15 // pred_check_branch
          %211 = sbr.rel (%p209) target = $region28
        $region27: #{mlp_forward.1} parent=15 // pred_region
          %s212 = sand.u32 %s16, 1
          %s213 = scalar_lea.sflag [#allocation6], %s212
          %s214 = sand.u32 %s90, 1
          %s215 = smul.addr %s214, 256
          %s216 = scalar_lea.vmem [#allocation5], %s215
          %s217 = smul.u32 32, %s24
          %s219 = ssub.s32 4096, 4096
          %220 = vsyncadd %s213, %s219
          %s221 = smul.addr %s217, 2
          %s222 = smul.addr %s221, 64
          %s223 = scalar_lea.hbm %s2, %s222
          %s224 = sshll.u32 %s216, 4
          %s225 = int_to_ptr.vmem [resolvable:$true] %s224
          %230 = dma.hbm_to_vmem [thread:$0]  %s223, 4096, %s225, %s213, 128, 128, 8
        $region28: #{mlp_forward.1} parent=15 // pred_fallthru
          _
        // Predicated region
        $region29: #{mlp_forward.1} parent=15 // pred_check
          %p231 = pneg %p126
        $region30: #{mlp_forward.1} parent=15 // pred_check_branch
          %233 = sbr.rel (%p231) target = $region32
        $region31: #{mlp_forward.1} parent=15 // pred_region
          %s234 = sand.u32 %s16, 1
          %s235 = scalar_lea.sflag [#allocation6], %s234
          %s236 = sand.u32 %s116, 1
          %s237 = smul.addr %s236, 256
          %s238 = scalar_lea.vmem [#allocation7], %s237
          %s239 = smul.u32 32, %s24
          %s241 = ssub.s32 4096, 4096
          %242 = vsyncadd %s235, %s241
          %s243 = smul.addr %s239, 2
          %s244 = smul.addr %s243, 64
          %s245 = scalar_lea.hbm %s3, %s244
          %s246 = sshll.u32 %s238, 4
          %s247 = int_to_ptr.vmem [resolvable:$true] %s246
          %252 = dma.hbm_to_vmem [thread:$0]  %s245, 4096, %s247, %s235, 128, 128, 8
        $region32: #{mlp_forward.1} parent=15 // pred_fallthru
          _
      $region16: #{mlp_forward.1} parent=5 // pred_fallthru
        _
      %p253 = scmp.le.s32.totalorder 1, %s16
      %p254 = scmp.lt.s32.totalorder %s16, 5
      %p255 = pnand %p253, %p254
      %p256 = pneg %p255
      // Predicated region
      $region33: #{mlp_forward.1} parent=5 // pred_check
        _
      $region34: #{mlp_forward.1} parent=5 // pred_check_branch
        %258 = sbr.rel (%p255) target = $region36
      $region35: #{mlp_forward.1} parent=5 // pred_region
        %s259 = ssub.s32 %s16, 1
        %s260 = sand.u32 %s67, 1
        %s261 = scalar_lea.sflag [#allocation4], %s260
        %s262 = sand.u32 %s67, 1
        %s263 = smul.addr %s262, 256
        %s264 = scalar_lea.vmem [#allocation3], %s263
        // Predicated region
        $region37: #{mlp_forward.1} parent=35 // pred_check
          %p265 = pneg %p80
        $region38: #{mlp_forward.1} parent=35 // pred_check_branch
          %267 = sbr.rel (%p265) target = $region40
        $region39: #{mlp_forward.1} parent=35 // pred_region
          %268 = dma.done %s261, 4096
        $region40: #{mlp_forward.1} parent=35 // pred_fallthru
          _
        %s269 = sand.u32 %s21, 1
        %s270 = scalar_lea.sflag [#allocation6], %s269
        %s271 = sand.u32 %s93, 1
        %s272 = smul.addr %s271, 256
        %s273 = scalar_lea.vmem [#allocation5], %s272
        // Predicated region
        $region41: #{mlp_forward.1} parent=35 // pred_check
          %p274 = pneg %p106
        $region42: #{mlp_forward.1} parent=35 // pred_check_branch
          %276 = sbr.rel (%p274) target = $region44
        $region43: #{mlp_forward.1} parent=35 // pred_region
          %277 = dma.done %s270, 4096
        $region44: #{mlp_forward.1} parent=35 // pred_fallthru
          _
        %s278 = sand.u32 %s21, 1
        %s279 = scalar_lea.sflag [#allocation6], %s278
        %s280 = sand.u32 %s119, 1
        %s281 = smul.addr %s280, 256
        %s282 = scalar_lea.vmem [#allocation7], %s281
        // Predicated region
        $region45: #{mlp_forward.1} parent=35 // pred_check
          %p283 = pneg %p132
        $region46: #{mlp_forward.1} parent=35 // pred_check_branch
          %285 = sbr.rel (%p283) target = $region48
        $region47: #{mlp_forward.1} parent=35 // pred_region
          %286 = dma.done %s279, 4096
        $region48: #{mlp_forward.1} parent=35 // pred_fallthru
          _
        %s287 = smul.u32 4, %s25
        %p288 = scmp.lt.s32.totalorder %s287, 7
        %s289 = scalar_select %p288, %s287, 7
        %s290 = smul.addr %s289, 2
        %s291 = smul.addr %s290, 4
        %s292 = scalar_lea.vmem %s0, %s291
        %p293 = pneg %p54
        %p294 = pneg %p51
        %s295 = sand.u32 %s67, 1
        %s296 = scalar_lea.sflag [#allocation4], %s295
        %s297 = sand.u32 %s67, 1
        %s298 = smul.addr %s297, 256
        %s299 = scalar_lea.vmem [#allocation3], %s298
        %p300 = pneg %p80
        %p301 = pneg %p77
        %s302 = sand.u32 %s21, 1
        %s303 = scalar_lea.sflag [#allocation6], %s302
        %s304 = sand.u32 %s93, 1
        %s305 = smul.addr %s304, 256
        %s306 = scalar_lea.vmem [#allocation5], %s305
        %p307 = pneg %p106
        %p308 = pneg %p103
        %s309 = sand.u32 %s21, 1
        %s310 = scalar_lea.sflag [#allocation6], %s309
        %s311 = sand.u32 %s119, 1
        %s312 = smul.addr %s311, 256
        %s313 = scalar_lea.vmem [#allocation7], %s312
        %p314 = pneg %p132
        %p315 = pneg %p129
        %p316 = pneg %p158
        %p317 = pneg %p155
        %s318 = smul.u32 4, %s25
        %p319 = scmp.lt.s32.totalorder %s318, 7
        %s320 = scalar_select %p319, %s318, 7
        %s321 = smul.addr %s320, 2
        %s322 = smul.addr %s321, 4
        %s323 = scalar_lea.vmem %s4, %s322
        %s324 = smul.u32 4, %s25
        %p325 = scmp.lt.s32.totalorder %s324, 7
        %s326 = scalar_select %p325, %s324, 7
        %s327 = smul.addr %s326, 2
        %s328 = smul.addr %s327, 4
        %s329 = scalar_lea.vmem %s0, %s328
        %s330 = smul.u32 4, %s25
        %s331 = smul.u32 32, %s26
        %s332 = smul.u32 32, %s26
        %s333 = smul.u32 32, %s26
        %s334 = smul.u32 4, %s25
        %p335 = scmp.lt.s32.totalorder %s334, 7
        %s336 = scalar_select %p335, %s334, 7
        %s337 = smul.addr %s336, 2
        %s338 = smul.addr %s337, 4
        %s339 = scalar_lea.vmem %s4, %s338
        %s340 = smul.u32 4, %s25
        %p341 = scmp.eq.s32.totalorder %s26, 0
        // Predicated region
        $region49: #{mlp_forward.1} parent=35 // pred_check
          %p342 = pneg %p341
        $region50: #{mlp_forward.1} parent=35 // pred_check_branch
          %344 = sbr.rel (%p342) target = $region52
        $region51: #{mlp_forward.1} parent=35 // pred_region
          %345 = vst [vmem:[#allocation2] sm:$0xff] 0.0
          %346 = vst [vmem:[#allocation2 + $0x8] sm:$0xff] 0.0
          %347 = vst [vmem:[#allocation2 + $0x10] sm:$0xff] 0.0
          %348 = vst [vmem:[#allocation2 + $0x18] sm:$0xff] 0.0
          %349 = vst [vmem:[#allocation2 + $0x20] sm:$0xff] 0.0
          %350 = vst [vmem:[#allocation2 + $0x28] sm:$0xff] 0.0
          %351 = vst [vmem:[#allocation2 + $0x30] sm:$0xff] 0.0
          %352 = vst [vmem:[#allocation2 + $0x38] sm:$0xff] 0.0
        $region52: #{mlp_forward.1} parent=35 // pred_fallthru
          _
        %v353 = vld [vmem:[%s329] sm:$0xff]
        %v354 = vld [vmem:[%s329 + $0x8] sm:$0xff]
        %v355 = vld [vmem:[%s329 + $0x10] sm:$0xff]
        %v356 = vld [vmem:[%s329 + $0x18] sm:$0xff]
        %v357 = vld [vmem:[%s264] sm:$0xff]
        %v358 = vld [vmem:[%s264 + $0x8] sm:$0xff]
        %v359 = vld [vmem:[%s264 + $0x10] sm:$0xff]
        %v360 = vld [vmem:[%s264 + $0x18] sm:$0xff]
        %v361 = vld [vmem:[%s264 + $0x20] sm:$0xff]
        %v362 = vld [vmem:[%s264 + $0x28] sm:$0xff]
        %v363 = vld [vmem:[%s264 + $0x30] sm:$0xff]
        %v364 = vld [vmem:[%s264 + $0x38] sm:$0xff]
        %v365 = vld [vmem:[%s264 + $0x40] sm:$0xff]
        %v366 = vld [vmem:[%s264 + $0x48] sm:$0xff]
        %v367 = vld [vmem:[%s264 + $0x50] sm:$0xff]
        %v368 = vld [vmem:[%s264 + $0x58] sm:$0xff]
        %v369 = vld [vmem:[%s264 + $0x60] sm:$0xff]
        %v370 = vld [vmem:[%s264 + $0x68] sm:$0xff]
        %v371 = vld [vmem:[%s264 + $0x70] sm:$0xff]
        %v372 = vld [vmem:[%s264 + $0x78] sm:$0xff]
        %v373 = vld [vmem:[%s264 + $0x80] sm:$0xff]
        %v374 = vld [vmem:[%s264 + $0x88] sm:$0xff]
        %v375 = vld [vmem:[%s264 + $0x90] sm:$0xff]
        %v376 = vld [vmem:[%s264 + $0x98] sm:$0xff]
        %v377 = vld [vmem:[%s264 + $0xa0] sm:$0xff]
        %v378 = vld [vmem:[%s264 + $0xa8] sm:$0xff]
        %v379 = vld [vmem:[%s264 + $0xb0] sm:$0xff]
        %v380 = vld [vmem:[%s264 + $0xb8] sm:$0xff]
        %v381 = vld [vmem:[%s264 + $0xc0] sm:$0xff]
        %v382 = vld [vmem:[%s264 + $0xc8] sm:$0xff]
        %v383 = vld [vmem:[%s264 + $0xd0] sm:$0xff]
        %v384 = vld [vmem:[%s264 + $0xd8] sm:$0xff]
        %v385 = vld [vmem:[%s264 + $0xe0] sm:$0xff]
        %v386 = vld [vmem:[%s264 + $0xe8] sm:$0xff]
        %v387 = vld [vmem:[%s264 + $0xf0] sm:$0xff]
        %v388 = vld [vmem:[%s264 + $0xf8] sm:$0xff]
        %v393 = vunpack.c.l.b16 %v353
        %v394 = vunpack.c.h.b16 %v353
        %v395 = vunpack.c.l.b16 %v354
        %v396 = vunpack.c.h.b16 %v354
        %v397 = vunpack.c.l.b16 %v355
        %v398 = vunpack.c.h.b16 %v355
        %v399 = vunpack.c.l.b16 %v356
        %v400 = vunpack.c.h.b16 %v356
        %v401 = vpack.c.b16 %v395, %v393
        %v402 = vpack.c.b16 %v396, %v394
        %v403 = vpack.c.b16 %v399, %v397
        %v404 = vpack.c.b16 %v400, %v398
        %v441 = vunpack.c.l.b16 %v357
        %v442 = vunpack.c.h.b16 %v357
        %v443 = vunpack.c.l.b16 %v358
        %v444 = vunpack.c.h.b16 %v358
        %v445 = vunpack.c.l.b16 %v359
        %v446 = vunpack.c.h.b16 %v359
        %v447 = vunpack.c.l.b16 %v360
        %v448 = vunpack.c.h.b16 %v360
        %v449 = vunpack.c.l.b16 %v361
        %v450 = vunpack.c.h.b16 %v361
        %v451 = vunpack.c.l.b16 %v362
        %v452 = vunpack.c.h.b16 %v362
        %v453 = vunpack.c.l.b16 %v363
        %v454 = vunpack.c.h.b16 %v363
        %v455 = vunpack.c.l.b16 %v364
        %v456 = vunpack.c.h.b16 %v364
        %v457 = vunpack.c.l.b16 %v365
        %v458 = vunpack.c.h.b16 %v365
        %v459 = vunpack.c.l.b16 %v366
        %v460 = vunpack.c.h.b16 %v366
        %v461 = vunpack.c.l.b16 %v367
        %v462 = vunpack.c.h.b16 %v367
        %v463 = vunpack.c.l.b16 %v368
        %v464 = vunpack.c.h.b16 %v368
        %v465 = vunpack.c.l.b16 %v369
        %v466 = vunpack.c.h.b16 %v369
        %v467 = vunpack.c.l.b16 %v370
        %v468 = vunpack.c.h.b16 %v370
        %v469 = vunpack.c.l.b16 %v371
        %v470 = vunpack.c.h.b16 %v371
        %v471 = vunpack.c.l.b16 %v372
        %v472 = vunpack.c.h.b16 %v372
        %v473 = vunpack.c.l.b16 %v373
        %v474 = vunpack.c.h.b16 %v373
        %v475 = vunpack.c.l.b16 %v374
        %v476 = vunpack.c.h.b16 %v374
        %v477 = vunpack.c.l.b16 %v375
        %v478 = vunpack.c.h.b16 %v375
        %v479 = vunpack.c.l.b16 %v376
        %v480 = vunpack.c.h.b16 %v376
        %v481 = vunpack.c.l.b16 %v377
        %v482 = vunpack.c.h.b16 %v377
        %v483 = vunpack.c.l.b16 %v378
        %v484 = vunpack.c.h.b16 %v378
        %v485 = vunpack.c.l.b16 %v379
        %v486 = vunpack.c.h.b16 %v379
        %v487 = vunpack.c.l.b16 %v380
        %v488 = vunpack.c.h.b16 %v380
        %v489 = vunpack.c.l.b16 %v381
        %v490 = vunpack.c.h.b16 %v381
        %v491 = vunpack.c.l.b16 %v382
        %v492 = vunpack.c.h.b16 %v382
        %v493 = vunpack.c.l.b16 %v383
        %v494 = vunpack.c.h.b16 %v383
        %v495 = vunpack.c.l.b16 %v384
        %v496 = vunpack.c.h.b16 %v384
        %v497 = vunpack.c.l.b16 %v385
        %v498 = vunpack.c.h.b16 %v385
        %v499 = vunpack.c.l.b16 %v386
        %v500 = vunpack.c.h.b16 %v386
        %v501 = vunpack.c.l.b16 %v387
        %v502 = vunpack.c.h.b16 %v387
        %v503 = vunpack.c.l.b16 %v388
        %v504 = vunpack.c.h.b16 %v388
        %v505 = vpack.c.b16 %v443, %v441
        %v506 = vpack.c.b16 %v444, %v442
        %v507 = vpack.c.b16 %v447, %v445
        %v508 = vpack.c.b16 %v448, %v446
        %v509 = vpack.c.b16 %v451, %v449
        %v510 = vpack.c.b16 %v452, %v450
        %v511 = vpack.c.b16 %v455, %v453
        %v512 = vpack.c.b16 %v456, %v454
        %v513 = vpack.c.b16 %v459, %v457
        %v514 = vpack.c.b16 %v460, %v458
        %v515 = vpack.c.b16 %v463, %v461
        %v516 = vpack.c.b16 %v464, %v462
        %v517 = vpack.c.b16 %v467, %v465
        %v518 = vpack.c.b16 %v468, %v466
        %v519 = vpack.c.b16 %v471, %v469
        %v520 = vpack.c.b16 %v472, %v470
        %v521 = vpack.c.b16 %v475, %v473
        %v522 = vpack.c.b16 %v476, %v474
        %v523 = vpack.c.b16 %v479, %v477
        %v524 = vpack.c.b16 %v480, %v478
        %v525 = vpack.c.b16 %v483, %v481
        %v526 = vpack.c.b16 %v484, %v482
        %v527 = vpack.c.b16 %v487, %v485
        %v528 = vpack.c.b16 %v488, %v486
        %v529 = vpack.c.b16 %v491, %v489
        %v530 = vpack.c.b16 %v492, %v490
        %v531 = vpack.c.b16 %v495, %v493
        %v532 = vpack.c.b16 %v496, %v494
        %v533 = vpack.c.b16 %v499, %v497
        %v534 = vpack.c.b16 %v500, %v498
        %v535 = vpack.c.b16 %v503, %v501
        %v536 = vpack.c.b16 %v504, %v502
        %569 = vmatprep.subr.bf16.mxu0 %v520
        %570 = vmatpush1.bf16.xpose.msra.mxu0 %v519
        %571 = vmatprep.subr.bf16.mxu0 %v518
        %572 = vmatpush1.bf16.xpose.msra.mxu0 %v517
        %573 = vmatprep.subr.bf16.mxu0 %v516
        %574 = vmatpush1.bf16.xpose.msra.mxu0 %v515
        %575 = vmatprep.subr.bf16.mxu0 %v514
        %576 = vmatpush1.bf16.xpose.msra.mxu0 %v513
        %577 = vmatprep.subr.bf16.mxu0 %v512
        %578 = vmatpush1.bf16.xpose.msra.mxu0 %v511
        %579 = vmatprep.subr.bf16.mxu0 %v510
        %580 = vmatpush1.bf16.xpose.msra.mxu0 %v509
        %581 = vmatprep.subr.bf16.mxu0 %v508
        %582 = vmatpush1.bf16.xpose.msra.mxu0 %v507
        %583 = vmatprep.subr.bf16.mxu0 %v506
        %584 = vmatpush1.bf16.xpose.msra.mxu0 %v505
        %585 = vmatprep.subr.bf16.mxu0 %v536
        %586 = vmatpush2.bf16.xpose.msra.mxu0 %v535
        %587 = vmatprep.subr.bf16.mxu0 %v534
        %588 = vmatpush2.bf16.xpose.msra.mxu0 %v533
        %589 = vmatprep.subr.bf16.mxu0 %v532
        %590 = vmatpush2.bf16.xpose.msra.mxu0 %v531
        %591 = vmatprep.subr.bf16.mxu0 %v530
        %592 = vmatpush2.bf16.xpose.msra.mxu0 %v529
        %593 = vmatprep.subr.bf16.mxu0 %v528
        %594 = vmatpush2.bf16.xpose.msra.mxu0 %v527
        %595 = vmatprep.subr.bf16.mxu0 %v526
        %596 = vmatpush2.bf16.xpose.msra.mxu0 %v525
        %597 = vmatprep.subr.bf16.mxu0 %v524
        %598 = vmatpush2.bf16.xpose.msra.mxu0 %v523
        %599 = vmatprep.subr.bf16.mxu0 %v522
        %600 = vmatpush2.bf16.xpose.msra.mxu0 %v521
        %601 = vmatprep.mubr.bf16.mxu0 %v402
        %602 = vmatmul.mubr.bf16.gmra.mxu0 %v401
        %v603 = vpop.f32.mrf.mxu0
        %v604 = vadd.f32 0.0, %v603
        %v605 = vpop.f32.mrf.mxu0
        %v606 = vadd.f32 0.0, %v605
        %v607 = vpop.f32.mrf.mxu0
        %v608 = vadd.f32 0.0, %v607
        %v609 = vpop.f32.mrf.mxu0
        %v610 = vadd.f32 0.0, %v609
        %611 = vmatprep.mubr.bf16.mxu0 %v404
        %612 = vmatmul.mubr.bf16.gmra.mxu0 %v403
        %v613 = vpop.f32.mrf.mxu0
        %v614 = vadd.f32 0.0, %v613
        %v615 = vpop.f32.mrf.mxu0
        %v616 = vadd.f32 0.0, %v615
        %v617 = vpop.f32.mrf.mxu0
        %v618 = vadd.f32 0.0, %v617
        %v619 = vpop.f32.mrf.mxu0
        %v620 = vadd.f32 0.0, %v619
        %621 = vdwg.mxu0
        %v622 = vld [vmem:[%s273] sm:$0xff]
        %v623 = vld [vmem:[%s273 + $0x8] sm:$0xff]
        %v624 = vld [vmem:[%s273 + $0x10] sm:$0xff]
        %v625 = vld [vmem:[%s273 + $0x18] sm:$0xff]
        %v626 = vld [vmem:[%s273 + $0x20] sm:$0xff]
        %v627 = vld [vmem:[%s273 + $0x28] sm:$0xff]
        %v628 = vld [vmem:[%s273 + $0x30] sm:$0xff]
        %v629 = vld [vmem:[%s273 + $0x38] sm:$0xff]
        %v630 = vld [vmem:[%s273 + $0x40] sm:$0xff]
        %v631 = vld [vmem:[%s273 + $0x48] sm:$0xff]
        %v632 = vld [vmem:[%s273 + $0x50] sm:$0xff]
        %v633 = vld [vmem:[%s273 + $0x58] sm:$0xff]
        %v634 = vld [vmem:[%s273 + $0x60] sm:$0xff]
        %v635 = vld [vmem:[%s273 + $0x68] sm:$0xff]
        %v636 = vld [vmem:[%s273 + $0x70] sm:$0xff]
        %v637 = vld [vmem:[%s273 + $0x78] sm:$0xff]
        %v638 = vld [vmem:[%s273 + $0x80] sm:$0xff]
        %v639 = vld [vmem:[%s273 + $0x88] sm:$0xff]
        %v640 = vld [vmem:[%s273 + $0x90] sm:$0xff]
        %v641 = vld [vmem:[%s273 + $0x98] sm:$0xff]
        %v642 = vld [vmem:[%s273 + $0xa0] sm:$0xff]
        %v643 = vld [vmem:[%s273 + $0xa8] sm:$0xff]
        %v644 = vld [vmem:[%s273 + $0xb0] sm:$0xff]
        %v645 = vld [vmem:[%s273 + $0xb8] sm:$0xff]
        %v646 = vld [vmem:[%s273 + $0xc0] sm:$0xff]
        %v647 = vld [vmem:[%s273 + $0xc8] sm:$0xff]
        %v648 = vld [vmem:[%s273 + $0xd0] sm:$0xff]
        %v649 = vld [vmem:[%s273 + $0xd8] sm:$0xff]
        %v650 = vld [vmem:[%s273 + $0xe0] sm:$0xff]
        %v651 = vld [vmem:[%s273 + $0xe8] sm:$0xff]
        %v652 = vld [vmem:[%s273 + $0xf0] sm:$0xff]
        %v653 = vld [vmem:[%s273 + $0xf8] sm:$0xff]
        %v686 = vunpack.c.l.b16 %v622
        %v687 = vunpack.c.h.b16 %v622
        %v688 = vunpack.c.l.b16 %v623
        %v689 = vunpack.c.h.b16 %v623
        %v690 = vunpack.c.l.b16 %v624
        %v691 = vunpack.c.h.b16 %v624
        %v692 = vunpack.c.l.b16 %v625
        %v693 = vunpack.c.h.b16 %v625
        %v694 = vunpack.c.l.b16 %v626
        %v695 = vunpack.c.h.b16 %v626
        %v696 = vunpack.c.l.b16 %v627
        %v697 = vunpack.c.h.b16 %v627
        %v698 = vunpack.c.l.b16 %v628
        %v699 = vunpack.c.h.b16 %v628
        %v700 = vunpack.c.l.b16 %v629
        %v701 = vunpack.c.h.b16 %v629
        %v702 = vunpack.c.l.b16 %v630
        %v703 = vunpack.c.h.b16 %v630
        %v704 = vunpack.c.l.b16 %v631
        %v705 = vunpack.c.h.b16 %v631
        %v706 = vunpack.c.l.b16 %v632
        %v707 = vunpack.c.h.b16 %v632
        %v708 = vunpack.c.l.b16 %v633
        %v709 = vunpack.c.h.b16 %v633
        %v710 = vunpack.c.l.b16 %v634
        %v711 = vunpack.c.h.b16 %v634
        %v712 = vunpack.c.l.b16 %v635
        %v713 = vunpack.c.h.b16 %v635
        %v714 = vunpack.c.l.b16 %v636
        %v715 = vunpack.c.h.b16 %v636
        %v716 = vunpack.c.l.b16 %v637
        %v717 = vunpack.c.h.b16 %v637
        %v718 = vunpack.c.l.b16 %v638
        %v719 = vunpack.c.h.b16 %v638
        %v720 = vunpack.c.l.b16 %v639
        %v721 = vunpack.c.h.b16 %v639
        %v722 = vunpack.c.l.b16 %v640
        %v723 = vunpack.c.h.b16 %v640
        %v724 = vunpack.c.l.b16 %v641
        %v725 = vunpack.c.h.b16 %v641
        %v726 = vunpack.c.l.b16 %v642
        %v727 = vunpack.c.h.b16 %v642
        %v728 = vunpack.c.l.b16 %v643
        %v729 = vunpack.c.h.b16 %v643
        %v730 = vunpack.c.l.b16 %v644
        %v731 = vunpack.c.h.b16 %v644
        %v732 = vunpack.c.l.b16 %v645
        %v733 = vunpack.c.h.b16 %v645
        %v734 = vunpack.c.l.b16 %v646
        %v735 = vunpack.c.h.b16 %v646
        %v736 = vunpack.c.l.b16 %v647
        %v737 = vunpack.c.h.b16 %v647
        %v738 = vunpack.c.l.b16 %v648
        %v739 = vunpack.c.h.b16 %v648
        %v740 = vunpack.c.l.b16 %v649
        %v741 = vunpack.c.h.b16 %v649
        %v742 = vunpack.c.l.b16 %v650
        %v743 = vunpack.c.h.b16 %v650
        %v744 = vunpack.c.l.b16 %v651
        %v745 = vunpack.c.h.b16 %v651
        %v746 = vunpack.c.l.b16 %v652
        %v747 = vunpack.c.h.b16 %v652
        %v748 = vunpack.c.l.b16 %v653
        %v749 = vunpack.c.h.b16 %v653
        %v750 = vpack.c.b16 %v688, %v686
        %v751 = vpack.c.b16 %v689, %v687
        %v752 = vpack.c.b16 %v692, %v690
        %v753 = vpack.c.b16 %v693, %v691
        %v754 = vpack.c.b16 %v696, %v694
        %v755 = vpack.c.b16 %v697, %v695
        %v756 = vpack.c.b16 %v700, %v698
        %v757 = vpack.c.b16 %v701, %v699
        %v758 = vpack.c.b16 %v704, %v702
        %v759 = vpack.c.b16 %v705, %v703
        %v760 = vpack.c.b16 %v708, %v706
        %v761 = vpack.c.b16 %v709, %v707
        %v762 = vpack.c.b16 %v712, %v710
        %v763 = vpack.c.b16 %v713, %v711
        %v764 = vpack.c.b16 %v716, %v714
        %v765 = vpack.c.b16 %v717, %v715
        %v766 = vpack.c.b16 %v720, %v718
        %v767 = vpack.c.b16 %v721, %v719
        %v768 = vpack.c.b16 %v724, %v722
        %v769 = vpack.c.b16 %v725, %v723
        %v770 = vpack.c.b16 %v728, %v726
        %v771 = vpack.c.b16 %v729, %v727
        %v772 = vpack.c.b16 %v732, %v730
        %v773 = vpack.c.b16 %v733, %v731
        %v774 = vpack.c.b16 %v736, %v734
        %v775 = vpack.c.b16 %v737, %v735
        %v776 = vpack.c.b16 %v740, %v738
        %v777 = vpack.c.b16 %v741, %v739
        %v778 = vpack.c.b16 %v744, %v742
        %v779 = vpack.c.b16 %v745, %v743
        %v780 = vpack.c.b16 %v748, %v746
        %v781 = vpack.c.b16 %v749, %v747
        %814 = vmatprep.subr.bf16.mxu0 %v765
        %815 = vmatpush1.bf16.xpose.msra.mxu0 %v764
        %816 = vmatprep.subr.bf16.mxu0 %v763
        %817 = vmatpush1.bf16.xpose.msra.mxu0 %v762
        %818 = vmatprep.subr.bf16.mxu0 %v761
        %819 = vmatpush1.bf16.xpose.msra.mxu0 %v760
        %820 = vmatprep.subr.bf16.mxu0 %v759
        %821 = vmatpush1.bf16.xpose.msra.mxu0 %v758
        %822 = vmatprep.subr.bf16.mxu0 %v757
        %823 = vmatpush1.bf16.xpose.msra.mxu0 %v756
        %824 = vmatprep.subr.bf16.mxu0 %v755
        %825 = vmatpush1.bf16.xpose.msra.mxu0 %v754
        %826 = vmatprep.subr.bf16.mxu0 %v753
        %827 = vmatpush1.bf16.xpose.msra.mxu0 %v752
        %828 = vmatprep.subr.bf16.mxu0 %v751
        %829 = vmatpush1.bf16.xpose.msra.mxu0 %v750
        %830 = vmatprep.subr.bf16.mxu0 %v781
        %831 = vmatpush2.bf16.xpose.msra.mxu0 %v780
        %832 = vmatprep.subr.bf16.mxu0 %v779
        %833 = vmatpush2.bf16.xpose.msra.mxu0 %v778
        %834 = vmatprep.subr.bf16.mxu0 %v777
        %835 = vmatpush2.bf16.xpose.msra.mxu0 %v776
        %836 = vmatprep.subr.bf16.mxu0 %v775
        %837 = vmatpush2.bf16.xpose.msra.mxu0 %v774
        %838 = vmatprep.subr.bf16.mxu0 %v773
        %839 = vmatpush2.bf16.xpose.msra.mxu0 %v772
        %840 = vmatprep.subr.bf16.mxu0 %v771
        %841 = vmatpush2.bf16.xpose.msra.mxu0 %v770
        %842 = vmatprep.subr.bf16.mxu0 %v769
        %843 = vmatpush2.bf16.xpose.msra.mxu0 %v768
        %844 = vmatprep.subr.bf16.mxu0 %v767
        %845 = vmatpush2.bf16.xpose.msra.mxu0 %v766
        %846 = vmatprep.mubr.bf16.mxu0 %v402
        %847 = vmatmul.mubr.bf16.gmra.mxu0 %v401
        %v848 = vpop.f32.mrf.mxu0
        %v849 = vadd.f32 0.0, %v848
        %v850 = vpop.f32.mrf.mxu0
        %v851 = vadd.f32 0.0, %v850
        %v852 = vpop.f32.mrf.mxu0
        %v853 = vadd.f32 0.0, %v852
        %v854 = vpop.f32.mrf.mxu0
        %v855 = vadd.f32 0.0, %v854
        %856 = vmatprep.mubr.bf16.mxu0 %v404
        %857 = vmatmul.mubr.bf16.gmra.mxu0 %v403
        %v858 = vpop.f32.mrf.mxu0
        %v859 = vadd.f32 0.0, %v858
        %v860 = vpop.f32.mrf.mxu0
        %v861 = vadd.f32 0.0, %v860
        %v862 = vpop.f32.mrf.mxu0
        %v863 = vadd.f32 0.0, %v862
        %v864 = vpop.f32.mrf.mxu0
        %v865 = vadd.f32 0.0, %v864
        %866 = vdwg.mxu0
        %v867 = vxor.u32 %v604, 2147483648
        %v868 = vxor.u32 %v606, 2147483648
        %v869 = vxor.u32 %v608, 2147483648
        %v870 = vxor.u32 %v610, 2147483648
        %v871 = vxor.u32 %v614, 2147483648
        %v872 = vxor.u32 %v616, 2147483648
        %v873 = vxor.u32 %v618, 2147483648
        %v874 = vxor.u32 %v620, 2147483648
        %v875 = vmul.f32 %v867, 1.442695
        %v876 = vpow.pop %v875
        %v877 = vmul.f32 %v868, 1.442695
        %v878 = vpow.pop %v877
        %v879 = vmul.f32 %v869, 1.442695
        %v880 = vpow.pop %v879
        %v881 = vmul.f32 %v870, 1.442695
        %v882 = vpow.pop %v881
        %v883 = vmul.f32 %v871, 1.442695
        %v884 = vpow.pop %v883
        %v885 = vmul.f32 %v872, 1.442695
        %v886 = vpow.pop %v885
        %v887 = vmul.f32 %v873, 1.442695
        %v888 = vpow.pop %v887
        %v889 = vmul.f32 %v874, 1.442695
        %v890 = vpow.pop %v889
        %v891 = vadd.f32 %v876, 1.0
        %v892 = vadd.f32 %v878, 1.0
        %v893 = vadd.f32 %v880, 1.0
        %v894 = vadd.f32 %v882, 1.0
        %v895 = vadd.f32 %v884, 1.0
        %v896 = vadd.f32 %v886, 1.0
        %v897 = vadd.f32 %v888, 1.0
        %v898 = vadd.f32 %v890, 1.0
        %v899 = vrcp.pop %v891
        %v900 = vmul.f32 1.0, %v899
        %v901 = vrcp.pop %v892
        %v902 = vmul.f32 1.0, %v901
        %v903 = vrcp.pop %v893
        %v904 = vmul.f32 1.0, %v903
        %v905 = vrcp.pop %v894
        %v906 = vmul.f32 1.0, %v905
        %v907 = vrcp.pop %v895
        %v908 = vmul.f32 1.0, %v907
        %v909 = vrcp.pop %v896
        %v910 = vmul.f32 1.0, %v909
        %v911 = vrcp.pop %v897
        %v912 = vmul.f32 1.0, %v911
        %v913 = vrcp.pop %v898
        %v914 = vmul.f32 1.0, %v913
        %v915 = vmul.f32 %v604, %v900
        %v916 = vmul.f32 %v606, %v902
        %v917 = vmul.f32 %v608, %v904
        %v918 = vmul.f32 %v610, %v906
        %v919 = vmul.f32 %v614, %v908
        %v920 = vmul.f32 %v616, %v910
        %v921 = vmul.f32 %v618, %v912
        %v922 = vmul.f32 %v620, %v914
        %v923 = vmul.f32 %v915, %v849
        %v924 = vmul.f32 %v916, %v851
        %v925 = vmul.f32 %v917, %v853
        %v926 = vmul.f32 %v918, %v855
        %v927 = vmul.f32 %v919, %v859
        %v928 = vmul.f32 %v920, %v861
        %v929 = vmul.f32 %v921, %v863
        %v930 = vmul.f32 %v922, %v865
        %v931 = vpack.c.bf16 %v925, %v923
        %v932 = vpack.c.bf16 %v926, %v924
        %v933 = vpack.c.bf16 %v929, %v927
        %v934 = vpack.c.bf16 %v930, %v928
        %v935 = vld [vmem:[%s282] sm:$0xff]
        %v936 = vld [vmem:[%s282 + $0x8] sm:$0xff]
        %v937 = vld [vmem:[%s282 + $0x10] sm:$0xff]
        %v938 = vld [vmem:[%s282 + $0x18] sm:$0xff]
        %v939 = vld [vmem:[%s282 + $0x20] sm:$0xff]
        %v940 = vld [vmem:[%s282 + $0x28] sm:$0xff]
        %v941 = vld [vmem:[%s282 + $0x30] sm:$0xff]
        %v942 = vld [vmem:[%s282 + $0x38] sm:$0xff]
        %v943 = vld [vmem:[%s282 + $0x40] sm:$0xff]
        %v944 = vld [vmem:[%s282 + $0x48] sm:$0xff]
        %v945 = vld [vmem:[%s282 + $0x50] sm:$0xff]
        %v946 = vld [vmem:[%s282 + $0x58] sm:$0xff]
        %v947 = vld [vmem:[%s282 + $0x60] sm:$0xff]
        %v948 = vld [vmem:[%s282 + $0x68] sm:$0xff]
        %v949 = vld [vmem:[%s282 + $0x70] sm:$0xff]
        %v950 = vld [vmem:[%s282 + $0x78] sm:$0xff]
        %v951 = vld [vmem:[%s282 + $0x80] sm:$0xff]
        %v952 = vld [vmem:[%s282 + $0x88] sm:$0xff]
        %v953 = vld [vmem:[%s282 + $0x90] sm:$0xff]
        %v954 = vld [vmem:[%s282 + $0x98] sm:$0xff]
        %v955 = vld [vmem:[%s282 + $0xa0] sm:$0xff]
        %v956 = vld [vmem:[%s282 + $0xa8] sm:$0xff]
        %v957 = vld [vmem:[%s282 + $0xb0] sm:$0xff]
        %v958 = vld [vmem:[%s282 + $0xb8] sm:$0xff]
        %v959 = vld [vmem:[%s282 + $0xc0] sm:$0xff]
        %v960 = vld [vmem:[%s282 + $0xc8] sm:$0xff]
        %v961 = vld [vmem:[%s282 + $0xd0] sm:$0xff]
        %v962 = vld [vmem:[%s282 + $0xd8] sm:$0xff]
        %v963 = vld [vmem:[%s282 + $0xe0] sm:$0xff]
        %v964 = vld [vmem:[%s282 + $0xe8] sm:$0xff]
        %v965 = vld [vmem:[%s282 + $0xf0] sm:$0xff]
        %v966 = vld [vmem:[%s282 + $0xf8] sm:$0xff]
        %v999 = vunpack.c.l.b16 %v935
        %v1000 = vunpack.c.h.b16 %v935
        %v1001 = vunpack.c.l.b16 %v936
        %v1002 = vunpack.c.h.b16 %v936
        %v1003 = vunpack.c.l.b16 %v937
        %v1004 = vunpack.c.h.b16 %v937
        %v1005 = vunpack.c.l.b16 %v938
        %v1006 = vunpack.c.h.b16 %v938
        %v1007 = vunpack.c.l.b16 %v939
        %v1008 = vunpack.c.h.b16 %v939
        %v1009 = vunpack.c.l.b16 %v940
        %v1010 = vunpack.c.h.b16 %v940
        %v1011 = vunpack.c.l.b16 %v941
        %v1012 = vunpack.c.h.b16 %v941
        %v1013 = vunpack.c.l.b16 %v942
        %v1014 = vunpack.c.h.b16 %v942
        %v1015 = vunpack.c.l.b16 %v943
        %v1016 = vunpack.c.h.b16 %v943
        %v1017 = vunpack.c.l.b16 %v944
        %v1018 = vunpack.c.h.b16 %v944
        %v1019 = vunpack.c.l.b16 %v945
        %v1020 = vunpack.c.h.b16 %v945
        %v1021 = vunpack.c.l.b16 %v946
        %v1022 = vunpack.c.h.b16 %v946
        %v1023 = vunpack.c.l.b16 %v947
        %v1024 = vunpack.c.h.b16 %v947
        %v1025 = vunpack.c.l.b16 %v948
        %v1026 = vunpack.c.h.b16 %v948
        %v1027 = vunpack.c.l.b16 %v949
        %v1028 = vunpack.c.h.b16 %v949
        %v1029 = vunpack.c.l.b16 %v950
        %v1030 = vunpack.c.h.b16 %v950
        %v1031 = vunpack.c.l.b16 %v951
        %v1032 = vunpack.c.h.b16 %v951
        %v1033 = vunpack.c.l.b16 %v952
        %v1034 = vunpack.c.h.b16 %v952
        %v1035 = vunpack.c.l.b16 %v953
        %v1036 = vunpack.c.h.b16 %v953
        %v1037 = vunpack.c.l.b16 %v954
        %v1038 = vunpack.c.h.b16 %v954
        %v1039 = vunpack.c.l.b16 %v955
        %v1040 = vunpack.c.h.b16 %v955
        %v1041 = vunpack.c.l.b16 %v956
        %v1042 = vunpack.c.h.b16 %v956
        %v1043 = vunpack.c.l.b16 %v957
        %v1044 = vunpack.c.h.b16 %v957
        %v1045 = vunpack.c.l.b16 %v958
        %v1046 = vunpack.c.h.b16 %v958
        %v1047 = vunpack.c.l.b16 %v959
        %v1048 = vunpack.c.h.b16 %v959
        %v1049 = vunpack.c.l.b16 %v960
        %v1050 = vunpack.c.h.b16 %v960
        %v1051 = vunpack.c.l.b16 %v961
        %v1052 = vunpack.c.h.b16 %v961
        %v1053 = vunpack.c.l.b16 %v962
        %v1054 = vunpack.c.h.b16 %v962
        %v1055 = vunpack.c.l.b16 %v963
        %v1056 = vunpack.c.h.b16 %v963
        %v1057 = vunpack.c.l.b16 %v964
        %v1058 = vunpack.c.h.b16 %v964
        %v1059 = vunpack.c.l.b16 %v965
        %v1060 = vunpack.c.h.b16 %v965
        %v1061 = vunpack.c.l.b16 %v966
        %v1062 = vunpack.c.h.b16 %v966
        %v1063 = vpack.c.b16 %v1001, %v999
        %v1064 = vpack.c.b16 %v1002, %v1000
        %v1065 = vpack.c.b16 %v1005, %v1003
        %v1066 = vpack.c.b16 %v1006, %v1004
        %v1067 = vpack.c.b16 %v1009, %v1007
        %v1068 = vpack.c.b16 %v1010, %v1008
        %v1069 = vpack.c.b16 %v1013, %v1011
        %v1070 = vpack.c.b16 %v1014, %v1012
        %v1071 = vpack.c.b16 %v1017, %v1015
        %v1072 = vpack.c.b16 %v1018, %v1016
        %v1073 = vpack.c.b16 %v1021, %v1019
        %v1074 = vpack.c.b16 %v1022, %v1020
        %v1075 = vpack.c.b16 %v1025, %v1023
        %v1076 = vpack.c.b16 %v1026, %v1024
        %v1077 = vpack.c.b16 %v1029, %v1027
        %v1078 = vpack.c.b16 %v1030, %v1028
        %v1079 = vpack.c.b16 %v1033, %v1031
        %v1080 = vpack.c.b16 %v1034, %v1032
        %v1081 = vpack.c.b16 %v1037, %v1035
        %v1082 = vpack.c.b16 %v1038, %v1036
        %v1083 = vpack.c.b16 %v1041, %v1039
        %v1084 = vpack.c.b16 %v1042, %v1040
        %v1085 = vpack.c.b16 %v1045, %v1043
        %v1086 = vpack.c.b16 %v1046, %v1044
        %v1087 = vpack.c.b16 %v1049, %v1047
        %v1088 = vpack.c.b16 %v1050, %v1048
        %v1089 = vpack.c.b16 %v1053, %v1051
        %v1090 = vpack.c.b16 %v1054, %v1052
        %v1091 = vpack.c.b16 %v1057, %v1055
        %v1092 = vpack.c.b16 %v1058, %v1056
        %v1093 = vpack.c.b16 %v1061, %v1059
        %v1094 = vpack.c.b16 %v1062, %v1060
        %1127 = vmatprep.subr.bf16.mxu0 %v1078
        %1128 = vmatpush1.bf16.msra.mxu0 %v1077
        %1129 = vmatprep.subr.bf16.mxu0 %v1076
        %1130 = vmatpush1.bf16.msra.mxu0 %v1075
        %1131 = vmatprep.subr.bf16.mxu0 %v1074
        %1132 = vmatpush1.bf16.msra.mxu0 %v1073
        %1133 = vmatprep.subr.bf16.mxu0 %v1072
        %1134 = vmatpush1.bf16.msra.mxu0 %v1071
        %1135 = vmatprep.subr.bf16.mxu0 %v1070
        %1136 = vmatpush1.bf16.msra.mxu0 %v1069
        %1137 = vmatprep.subr.bf16.mxu0 %v1068
        %1138 = vmatpush1.bf16.msra.mxu0 %v1067
        %1139 = vmatprep.subr.bf16.mxu0 %v1066
        %1140 = vmatpush1.bf16.msra.mxu0 %v1065
        %1141 = vmatprep.subr.bf16.mxu0 %v1064
        %1142 = vmatpush1.bf16.msra.mxu0 %v1063
        %1143 = vmatprep.subr.bf16.mxu0 %v1094
        %1144 = vmatpush2.bf16.msra.mxu0 %v1093
        %1145 = vmatprep.subr.bf16.mxu0 %v1092
        %1146 = vmatpush2.bf16.msra.mxu0 %v1091
        %1147 = vmatprep.subr.bf16.mxu0 %v1090
        %1148 = vmatpush2.bf16.msra.mxu0 %v1089
        %1149 = vmatprep.subr.bf16.mxu0 %v1088
        %1150 = vmatpush2.bf16.msra.mxu0 %v1087
        %1151 = vmatprep.subr.bf16.mxu0 %v1086
        %1152 = vmatpush2.bf16.msra.mxu0 %v1085
        %1153 = vmatprep.subr.bf16.mxu0 %v1084
        %1154 = vmatpush2.bf16.msra.mxu0 %v1083
        %1155 = vmatprep.subr.bf16.mxu0 %v1082
        %1156 = vmatpush2.bf16.msra.mxu0 %v1081
        %1157 = vmatprep.subr.bf16.mxu0 %v1080
        %1158 = vmatpush2.bf16.msra.mxu0 %v1079
        %1159 = vmatprep.mubr.bf16.mxu0 %v932
        %1160 = vmatmul.mubr.bf16.gmra.mxu0 %v931
        %v1161 = vpop.f32.mrf.mxu0
        %v1162 = vadd.f32 0.0, %v1161
        %v1163 = vpop.f32.mrf.mxu0
        %v1164 = vadd.f32 0.0, %v1163
        %v1165 = vpop.f32.mrf.mxu0
        %v1166 = vadd.f32 0.0, %v1165
        %v1167 = vpop.f32.mrf.mxu0
        %v1168 = vadd.f32 0.0, %v1167
        %1169 = vmatprep.mubr.bf16.mxu0 %v934
        %1170 = vmatmul.mubr.bf16.gmra.mxu0 %v933
        %v1171 = vpop.f32.mrf.mxu0
        %v1172 = vadd.f32 0.0, %v1171
        %v1173 = vpop.f32.mrf.mxu0
        %v1174 = vadd.f32 0.0, %v1173
        %v1175 = vpop.f32.mrf.mxu0
        %v1176 = vadd.f32 0.0, %v1175
        %v1177 = vpop.f32.mrf.mxu0
        %v1178 = vadd.f32 0.0, %v1177
        %1179 = vdwg.mxu0
        %p1180 = scmp.eq.s32.totalorder %s26, 1
        %p1181 = scmp.ne.s32.totalorder %s26, 1
        // Predicated region
        $region53: #{mlp_forward.1} parent=35 // pred_check
          %p1182 = pneg %p1181
        $region54: #{mlp_forward.1} parent=35 // pred_check_branch
          %1184 = sbr.rel (%p1182) target = $region56
        $region55: #{mlp_forward.1} parent=35 // pred_region
          %v1185 = vld [vmem:[#allocation2] sm:$0xff]
          %v1186 = vld [vmem:[#allocation2 + $0x8] sm:$0xff]
          %v1187 = vld [vmem:[#allocation2 + $0x10] sm:$0xff]
          %v1188 = vld [vmem:[#allocation2 + $0x18] sm:$0xff]
          %v1189 = vld [vmem:[#allocation2 + $0x20] sm:$0xff]
          %v1190 = vld [vmem:[#allocation2 + $0x28] sm:$0xff]
          %v1191 = vld [vmem:[#allocation2 + $0x30] sm:$0xff]
          %v1192 = vld [vmem:[#allocation2 + $0x38] sm:$0xff]
          %v1193 = vadd.f32 %v1185, %v1162
          %v1194 = vadd.f32 %v1186, %v1164
          %v1195 = vadd.f32 %v1187, %v1166
          %v1196 = vadd.f32 %v1188, %v1168
          %v1197 = vadd.f32 %v1189, %v1172
          %v1198 = vadd.f32 %v1190, %v1174
          %v1199 = vadd.f32 %v1191, %v1176
          %v1200 = vadd.f32 %v1192, %v1178
          %1201 = vst [vmem:[#allocation2] sm:$0xff] %v1193
          %1202 = vst [vmem:[#allocation2 + $0x8] sm:$0xff] %v1194
          %1203 = vst [vmem:[#allocation2 + $0x10] sm:$0xff] %v1195
          %1204 = vst [vmem:[#allocation2 + $0x18] sm:$0xff] %v1196
          %1205 = vst [vmem:[#allocation2 + $0x20] sm:$0xff] %v1197
          %1206 = vst [vmem:[#allocation2 + $0x28] sm:$0xff] %v1198
          %1207 = vst [vmem:[#allocation2 + $0x30] sm:$0xff] %v1199
          %1208 = vst [vmem:[#allocation2 + $0x38] sm:$0xff] %v1200
        $region56: #{mlp_forward.1} parent=35 // pred_fallthru
          _
        // Predicated region
        $region57: #{mlp_forward.1} parent=35 // pred_check
          %p1209 = pneg %p1180
        $region58: #{mlp_forward.1} parent=35 // pred_check_branch
          %1211 = sbr.rel (%p1209) target = $region60
        $region59: #{mlp_forward.1} parent=35 // pred_region
          %v1212 = vld [vmem:[#allocation2] sm:$0xff]
          %v1213 = vld [vmem:[#allocation2 + $0x8] sm:$0xff]
          %v1214 = vld [vmem:[#allocation2 + $0x10] sm:$0xff]
          %v1215 = vld [vmem:[#allocation2 + $0x18] sm:$0xff]
          %v1216 = vld [vmem:[#allocation2 + $0x20] sm:$0xff]
          %v1217 = vld [vmem:[#allocation2 + $0x28] sm:$0xff]
          %v1218 = vld [vmem:[#allocation2 + $0x30] sm:$0xff]
          %v1219 = vld [vmem:[#allocation2 + $0x38] sm:$0xff]
          %v1220 = vadd.f32 %v1212, %v1162
          %v1221 = vadd.f32 %v1213, %v1164
          %v1222 = vadd.f32 %v1214, %v1166
          %v1223 = vadd.f32 %v1215, %v1168
          %v1224 = vadd.f32 %v1216, %v1172
          %v1225 = vadd.f32 %v1217, %v1174
          %v1226 = vadd.f32 %v1218, %v1176
          %v1227 = vadd.f32 %v1219, %v1178
          %v1228 = vpack.c.bf16 %v1222, %v1220
          %v1229 = vpack.c.bf16 %v1223, %v1221
          %v1230 = vpack.c.bf16 %v1226, %v1224
          %v1231 = vpack.c.bf16 %v1227, %v1225
          %v1236 = vunpack.c.l.b16 %v1228
          %v1237 = vunpack.c.l.b16 %v1229
          %v1238 = vunpack.c.h.b16 %v1228
          %v1239 = vunpack.c.h.b16 %v1229
          %v1240 = vunpack.c.l.b16 %v1230
          %v1241 = vunpack.c.l.b16 %v1231
          %v1242 = vunpack.c.h.b16 %v1230
          %v1243 = vunpack.c.h.b16 %v1231
          %v1244 = vpack.c.b16 %v1237, %v1236
          %v1245 = vpack.c.b16 %v1239, %v1238
          %v1246 = vpack.c.b16 %v1241, %v1240
          %v1247 = vpack.c.b16 %v1243, %v1242
          %1252 = vst [vmem:[%s339] sm:$0xff] %v1244
          %1253 = vst [vmem:[%s339 + $0x8] sm:$0xff] %v1245
          %1254 = vst [vmem:[%s339 + $0x10] sm:$0xff] %v1246
          %1255 = vst [vmem:[%s339 + $0x18] sm:$0xff] %v1247
        $region60: #{mlp_forward.1} parent=35 // pred_fallthru
          _
        %s1256 = smul.u32 4, %s25
        %p1257 = scmp.lt.s32.totalorder %s1256, 7
        %s1258 = scalar_select %p1257, %s1256, 7
        %s1259 = smul.addr %s1258, 2
        %s1260 = smul.addr %s1259, 4
        %s1261 = scalar_lea.vmem %s4, %s1260
        // Predicated region
        $region61: #{mlp_forward.1} parent=35 // pred_check
          %p1262 = pneg %p155
        $region62: #{mlp_forward.1} parent=35 // pred_check_branch
          %1264 = sbr.rel (%p1262) target = $region64
        $region63: #{mlp_forward.1} parent=35 // pred_region
          %s1265 = smul.u32 4, %s25
        $region64: #{mlp_forward.1} parent=35 // pred_fallthru
          _
      $region36: #{mlp_forward.1} parent=5 // pred_fallthru
        _
      %p1266 = scmp.le.s32.totalorder 2, %s16
      // Predicated region
      $region65: #{mlp_forward.1} parent=5 // pred_check
        %p1267 = pneg %p1266
      $region66: #{mlp_forward.1} parent=5 // pred_check_branch
        %1269 = sbr.rel (%p1267) target = $region68
      $region67: #{mlp_forward.1} parent=5 // pred_region
        %s1270 = ssub.s32 %s16, 2
        // Predicated region
        $region69: #{mlp_forward.1} parent=67 // pred_check
          %p1271 = pneg %p161
        $region70: #{mlp_forward.1} parent=67 // pred_check_branch
          %1273 = sbr.rel (%p1271) target = $region72
        $region71: #{mlp_forward.1} parent=67 // pred_region
          %s1274 = smul.u32 4, %s27
          %p1275 = scmp.lt.s32.totalorder %s1274, 7
          %s1276 = scalar_select %p1275, %s1274, 7
          %s1277 = smul.addr %s1276, 2
          %s1278 = smul.addr %s1277, 4
          %s1279 = scalar_lea.vmem %s4, %s1278
        $region72: #{mlp_forward.1} parent=67 // pred_fallthru
          _
      $region68: #{mlp_forward.1} parent=5 // pred_fallthru
        _
    $region6: #{mlp_forward.1} parent=1 // loop_footer
      %s20 = sadd.s32 1, %s16
    $region7: #{mlp_forward.1} parent=1 // loop_footer_branch
      %15 = sbr.rel target = $region3
    $region8: #{mlp_forward.1} parent=1 // loop_exit
      _
    %1280 = vsyncpa [#allocation4], 1
    %s1281 = scalar_lea.sflag [#allocation4], 1
    %1282 = vsyncpa %s1281, 1
    %1283 = vsyncpa [#allocation6], 1
    %s1284 = scalar_lea.sflag [#allocation6], 1
    %1285 = vsyncpa %s1284, 1

</llo_original>
